<compile_context>
chip_gen: v6e
topology: v6e:2x2x1
jax: 0.10.0
libtpu: 0.0.40
codegen_flags: <defaults>
</compile_context>

<pallas_src>
import functools

import jax
import jax.numpy as jnp
from jax import lax
from jax.experimental import pallas as pl
from jax.experimental.pallas import tpu as pltpu


def pointcn_kernel(x_ref, w1_ref, w2s_ref, gbe_ref, bo_ref, out_ref, *, B, C):
    w1 = w1_ref[...]                 # (C, C)   bf16  Conv1d(C, C, 1) weight
    w2s = w2s_ref[...]               # (O, 2C)  bf16  [conv2 | shot_cut] weights
    g1 = gbe_ref[:, 0:1]             # (C, 1) f32 -- static lane slices, no relayout
    be1 = gbe_ref[:, 1:2]
    g2 = gbe_ref[:, 2:3]
    be2 = gbe_ref[:, 3:4]
    bo = bo_ref[...]                 # (O, 1) f32 = b2 + bs

    def norm_relu_bf16(blocks, g, be):
        # InstanceNorm1d(eps=1e-3, no affine) per (b, c) over N, then
        # SyncBatchNorm (training batch stats over (B, N), eps=1e-5, affine
        # g/be), then ReLU, emitted directly as bf16 MXU operands.
        #
        # Exact fusion identities:
        #   mean_{B,N}[instnorm(t)]   == 0                 -> no BN mean pass
        #   mean_{N}  [instnorm(t)^2] == var / (var + eps) -> BN variance from
        #     the per-(b, c) instance stats, no second full-tensor reduction.
        mus, invs = [], []
        bvar = jnp.zeros((C, 1), jnp.float32)
        for b in range(B):
            mu = jnp.mean(blocks[b], axis=-1, keepdims=True)       # (C, 1)
            d = blocks[b] - mu
            var = jnp.mean(d * d, axis=-1, keepdims=True)          # (C, 1)
            inv = lax.rsqrt(var + 1e-3)                            # instnorm scale
            mus.append(mu)
            invs.append(inv)
            bvar = bvar + var * (inv * inv)                        # += var/(var+eps)
        bn = g * lax.rsqrt(bvar * (1.0 / B) + 1e-5)                # (C, 1)
        outs = []
        for b in range(B):
            scale = invs[b] * bn                                    # (C, 1)
            shift = be - mus[b] * scale                             # (C, 1)
            h = jnp.maximum(blocks[b] * scale + shift, 0.0)         # one FMA pass
            outs.append(h.astype(jnp.bfloat16))                     # cast fused here
        return outs

    xs = [x_ref[b] for b in range(B)]                               # (C, N) f32 views

    # Stage 1: IN + BN + ReLU -> Conv1d(C, C, 1).  (Conv bias b1 is dropped:
    # a per-channel constant is cancelled exactly by the next InstanceNorm.)
    h1 = norm_relu_bf16(xs, g1, be1)
    y1 = [jnp.dot(w1, h1[b], preferred_element_type=jnp.float32) for b in range(B)]

    # Stage 2: IN + BN + ReLU -> merged [Conv1d(C, O, 1) | shot_cut Conv1d]
    # as one K = 2C matmul per batch; residual add folded into accumulation.
    h2 = norm_relu_bf16(y1, g2, be2)
    for b in range(B):
        rhs = jnp.concatenate([h2[b], xs[b].astype(jnp.bfloat16)], axis=0)  # (2C, N)
        acc = jnp.dot(w2s, rhs, preferred_element_type=jnp.float32)         # (O, N)
        out_ref[b, :, :] = (acc + bo).astype(out_ref.dtype)


def _vmem_capacity_bytes():
    # Generation-aware: 64 MiB on v7x, 128 MiB on v5e/v6e.  Fall back to the
    # smallest (v7x-safe) value if the query is unavailable.
    try:
        return int(pltpu.get_tpu_info().vmem_capacity_bytes)
    except Exception:
        return 64 * 1024 * 1024


@jax.jit
def pointcn_forward(x, params):
    B, C, N = x.shape
    O = params["ws"].shape[0]

    cap = _vmem_capacity_bytes()
    budget = min(int(0.75 * cap), 100 * 1024 * 1024)
    # Approximate peak live set: x(f32) + h1(bf16) + y1(f32) + h2(bf16)
    # + out(f32) + per-batch (2C, N) bf16 merged operand + weights.
    est = B * N * (12 * C + 4 * O) + 4 * C * N + 2 * C * (C + 2 * O)
    if int(1.25 * est) > budget:
        raise ValueError(
            "PointCN pallas kernel: shapes too large for the single-invocation "
            "whole-in-VMEM design (est ~%d bytes vs budget %d); retile over N "
            "with a two-pass-stats grid." % (est, budget))

    # Pack parameters so the kernel needs no unaligned slicing or
    # lane->sublane relayouts:
    w1 = params["w1"].astype(jnp.bfloat16)                                   # (C, C)
    w2s = jnp.concatenate([params["w2"], params["ws"]],
                          axis=1).astype(jnp.bfloat16)                       # (O, 2C)
    gbe = jnp.stack(
        [params["g1"], params["be1"], params["g2"], params["be2"]], axis=1)  # (C, 4)
    bo = (params["b2"] + params["bs"])[:, None]                              # (O, 1)
    # params["b1"] is intentionally unused by the kernel: it is cancelled
    # exactly by the InstanceNorm that follows the first conv.

    cost = pl.CostEstimate(
        flops=2 * B * N * C * (C + 2 * O),
        transcendentals=2 * C * (B + 1),
        bytes_accessed=(B * C * N + B * O * N) * 4
        + 2 * C * (C + 2 * O) + 4 * C * 4 + 4 * O,
    )

    vmem = pl.BlockSpec(memory_space=pltpu.MemorySpace.VMEM)
    return pl.pallas_call(
        functools.partial(pointcn_kernel, B=B, C=C),
        out_shape=jax.ShapeDtypeStruct((B, O, N), jnp.float32),
        in_specs=[vmem, vmem, vmem, vmem, vmem],
        out_specs=vmem,
        compiler_params=pltpu.CompilerParams(vmem_limit_bytes=budget),
        cost_estimate=cost,
    )(x.astype(jnp.float32), w1, w2s, gbe, bo)


def _reference(x, params):
    # Pure-JAX reference with PyTorch semantics (InstanceNorm1d eps=1e-3 no
    # affine; SyncBatchNorm training batch stats eps=1e-5 with affine).  The
    # convs mirror the kernel's MXU precision (bf16 operands, f32 acc).
    def inorm(t, eps=1e-3):
        mu = jnp.mean(t, axis=-1, keepdims=True)
        var = jnp.mean((t - mu) ** 2, axis=-1, keepdims=True)
        return (t - mu) / jnp.sqrt(var + eps)

    def bnorm(t, g, b, eps=1e-5):
        mu = jnp.mean(t, axis=(0, 2), keepdims=True)
        var = jnp.mean((t - mu) ** 2, axis=(0, 2), keepdims=True)
        return (t - mu) / jnp.sqrt(var + eps) * g[None, :, None] + b[None, :, None]

    def conv(t, w, b):
        return jnp.einsum("oc,bcn->bon",
                          w.astype(jnp.bfloat16), t.astype(jnp.bfloat16),
                          preferred_element_type=jnp.float32) + b[None, :, None]

    h = inorm(x)
    h = bnorm(h, params["g1"], params["be1"])
    h = jax.nn.relu(h)
    h = conv(h, params["w1"], params["b1"])
    h = inorm(h)
    h = bnorm(h, params["g2"], params["be2"])
    h = jax.nn.relu(h)
    h = conv(h, params["w2"], params["b2"])
    return h + conv(x, params["ws"], params["bs"])


def init_params(key, channels, out_channels):
    C, O = channels, out_channels
    ks = jax.random.split(key, 6)
    bound = 1.0 / jnp.sqrt(C)  # PyTorch Conv1d default init bound (kernel=1)
    return {
        "w1": jax.random.uniform(ks[0], (C, C), jnp.float32, -bound, bound),
        "b1": jax.random.uniform(ks[1], (C,), jnp.float32, -bound, bound),
        "w2": jax.random.uniform(ks[2], (O, C), jnp.float32, -bound, bound),
        "b2": jax.random.uniform(ks[3], (O,), jnp.float32, -bound, bound),
        "ws": jax.random.uniform(ks[4], (O, C), jnp.float32, -bound, bound),
        "bs": jax.random.uniform(ks[5], (O,), jnp.float32, -bound, bound),
        # SyncBatchNorm affine params (PyTorch default init: ones / zeros)
        "g1": jnp.ones((C,), jnp.float32),
        "be1": jnp.zeros((C,), jnp.float32),
        "g2": jnp.ones((C,), jnp.float32),
        "be2": jnp.zeros((C,), jnp.float32),
    }


if __name__ == "__main__":
    B, C, N, O = 2, 8, 128, 16   # batch, channels, num points, out_channels
    key = jax.random.PRNGKey(0)
    kx, kp = jax.random.split(key)
    x = jax.random.normal(kx, (B, C, N), dtype=jnp.float32)
    params = init_params(kp, C, O)

    out = jax.block_until_ready(pointcn_forward(x, params))
    ref = _reference(x, params)

    assert out.shape == (B, O, N)
    # Tolerance accounts for bf16 MXU operand rounding plus the algebraically
    # exact (but FP-reordered) fused norm statistics / merged output matmul.
    err = jnp.max(jnp.abs(out - ref))
    assert jnp.allclose(out, ref, atol=2e-2, rtol=2e-2), (
        f"mismatch vs reference, max abs err {err}")

    print("KERNEL_OK")
</pallas_src>

<mosaic_0001>
module attributes {stable_mosaic.version = 11 : i64} {
  func.func @pointcn_kernel(%arg0: memref<2x8x128xf32, #tpu.memory_space<vmem>>, %arg1: memref<8x8xbf16, #tpu.memory_space<vmem>>, %arg2: memref<16x16xbf16, #tpu.memory_space<vmem>>, %arg3: memref<8x4xf32, #tpu.memory_space<vmem>>, %arg4: memref<16x1xf32, #tpu.memory_space<vmem>>, %arg5: memref<2x16x128xf32, #tpu.memory_space<vmem>>) attributes {dimension_semantics = [], scalar_prefetch = 0 : i64, scratch_operands = 0 : i64, tpu.core_type = #tpu.core_type<tc>} {
    %c0 = arith.constant 0 : index
    %c0_0 = arith.constant 0 : index
    %0 = vector.load %arg1[%c0, %c0_0] : memref<8x8xbf16, #tpu.memory_space<vmem>>, vector<8x8xbf16>
    %c0_1 = arith.constant 0 : index
    %c0_2 = arith.constant 0 : index
    %1 = vector.load %arg2[%c0_1, %c0_2] : memref<16x16xbf16, #tpu.memory_space<vmem>>, vector<16x16xbf16>
    %c0_3 = arith.constant 0 : index
    %c0_4 = arith.constant 0 : index
    %2 = vector.load %arg3[%c0_3, %c0_4] : memref<8x4xf32, #tpu.memory_space<vmem>>, vector<8x1xf32>
    %c0_5 = arith.constant 0 : index
    %c1 = arith.constant 1 : index
    %3 = vector.load %arg3[%c0_5, %c1] : memref<8x4xf32, #tpu.memory_space<vmem>>, vector<8x1xf32>
    %c0_6 = arith.constant 0 : index
    %c2 = arith.constant 2 : index
    %4 = vector.load %arg3[%c0_6, %c2] : memref<8x4xf32, #tpu.memory_space<vmem>>, vector<8x1xf32>
    %c0_7 = arith.constant 0 : index
    %c3 = arith.constant 3 : index
    %5 = vector.load %arg3[%c0_7, %c3] : memref<8x4xf32, #tpu.memory_space<vmem>>, vector<8x1xf32>
    %c0_8 = arith.constant 0 : index
    %c0_9 = arith.constant 0 : index
    %6 = vector.load %arg4[%c0_8, %c0_9] : memref<16x1xf32, #tpu.memory_space<vmem>>, vector<16x1xf32>
    %c0_10 = arith.constant 0 : index
    %c0_11 = arith.constant 0 : index
    %c0_12 = arith.constant 0 : index
    %7 = vector.load %arg0[%c0_10, %c0_11, %c0_12] : memref<2x8x128xf32, #tpu.memory_space<vmem>>, vector<1x8x128xf32>
    %8 = vector.shape_cast %7 : vector<1x8x128xf32> to vector<8x128xf32>
    %c1_13 = arith.constant 1 : index
    %c0_14 = arith.constant 0 : index
    %c0_15 = arith.constant 0 : index
    %9 = vector.load %arg0[%c1_13, %c0_14, %c0_15] : memref<2x8x128xf32, #tpu.memory_space<vmem>>, vector<1x8x128xf32>
    %10 = vector.shape_cast %9 : vector<1x8x128xf32> to vector<8x128xf32>
    %cst = arith.constant 0.000000e+00 : f32
    %11 = vector.broadcast %cst : f32 to vector<8x1xf32>
    %cst_16 = arith.constant dense<0.000000e+00> : vector<8xf32>
    %12 = vector.multi_reduction <add>, %8, %cst_16 [1] : vector<8x128xf32> to vector<8xf32>
    %13 = vector.shape_cast %12 : vector<8xf32> to vector<8x1xf32>
    %cst_17 = arith.constant 1.280000e+02 : f32
    %14 = vector.broadcast %cst_17 : f32 to vector<8x1xf32>
    %15 = arith.divf %13, %14 : vector<8x1xf32>
    %16 = vector.broadcast %15 : vector<8x1xf32> to vector<8x128xf32>
    %17 = arith.subf %8, %16 : vector<8x128xf32>
    %18 = arith.mulf %17, %17 : vector<8x128xf32>
    %cst_18 = arith.constant dense<0.000000e+00> : vector<8xf32>
    %19 = vector.multi_reduction <add>, %18, %cst_18 [1] : vector<8x128xf32> to vector<8xf32>
    %20 = vector.shape_cast %19 : vector<8xf32> to vector<8x1xf32>
    %cst_19 = arith.constant 1.280000e+02 : f32
    %21 = vector.broadcast %cst_19 : f32 to vector<8x1xf32>
    %22 = arith.divf %20, %21 : vector<8x1xf32>
    %cst_20 = arith.constant 1.000000e-03 : f32
    %23 = vector.broadcast %cst_20 : f32 to vector<8x1xf32>
    %24 = arith.addf %22, %23 : vector<8x1xf32>
    %25 = math.rsqrt %24 : vector<8x1xf32>
    %26 = arith.mulf %25, %25 : vector<8x1xf32>
    %27 = arith.mulf %22, %26 : vector<8x1xf32>
    %28 = arith.addf %11, %27 : vector<8x1xf32>
    %cst_21 = arith.constant dense<0.000000e+00> : vector<8xf32>
    %29 = vector.multi_reduction <add>, %10, %cst_21 [1] : vector<8x128xf32> to vector<8xf32>
    %30 = vector.shape_cast %29 : vector<8xf32> to vector<8x1xf32>
    %cst_22 = arith.constant 1.280000e+02 : f32
    %31 = vector.broadcast %cst_22 : f32 to vector<8x1xf32>
    %32 = arith.divf %30, %31 : vector<8x1xf32>
    %33 = vector.broadcast %32 : vector<8x1xf32> to vector<8x128xf32>
    %34 = arith.subf %10, %33 : vector<8x128xf32>
    %35 = arith.mulf %34, %34 : vector<8x128xf32>
    %cst_23 = arith.constant dense<0.000000e+00> : vector<8xf32>
    %36 = vector.multi_reduction <add>, %35, %cst_23 [1] : vector<8x128xf32> to vector<8xf32>
    %37 = vector.shape_cast %36 : vector<8xf32> to vector<8x1xf32>
    %cst_24 = arith.constant 1.280000e+02 : f32
    %38 = vector.broadcast %cst_24 : f32 to vector<8x1xf32>
    %39 = arith.divf %37, %38 : vector<8x1xf32>
    %cst_25 = arith.constant 1.000000e-03 : f32
    %40 = vector.broadcast %cst_25 : f32 to vector<8x1xf32>
    %41 = arith.addf %39, %40 : vector<8x1xf32>
    %42 = math.rsqrt %41 : vector<8x1xf32>
    %43 = arith.mulf %42, %42 : vector<8x1xf32>
    %44 = arith.mulf %39, %43 : vector<8x1xf32>
    %45 = arith.addf %28, %44 : vector<8x1xf32>
    %cst_26 = arith.constant 5.000000e-01 : f32
    %46 = vector.broadcast %cst_26 : f32 to vector<8x1xf32>
    %47 = arith.mulf %45, %46 : vector<8x1xf32>
    %cst_27 = arith.constant 9.99999974E-6 : f32
    %48 = vector.broadcast %cst_27 : f32 to vector<8x1xf32>
    %49 = arith.addf %47, %48 : vector<8x1xf32>
    %50 = math.rsqrt %49 : vector<8x1xf32>
    %51 = arith.mulf %2, %50 : vector<8x1xf32>
    %52 = arith.mulf %25, %51 : vector<8x1xf32>
    %53 = arith.mulf %15, %52 : vector<8x1xf32>
    %54 = arith.subf %3, %53 : vector<8x1xf32>
    %55 = vector.broadcast %52 : vector<8x1xf32> to vector<8x128xf32>
    %56 = arith.mulf %8, %55 : vector<8x128xf32>
    %57 = vector.broadcast %54 : vector<8x1xf32> to vector<8x128xf32>
    %58 = arith.addf %56, %57 : vector<8x128xf32>
    %cst_28 = arith.constant 0.000000e+00 : f32
    %59 = vector.broadcast %cst_28 : f32 to vector<8x128xf32>
    %60 = arith.maximumf %58, %59 : vector<8x128xf32>
    %61 = arith.truncf %60 : vector<8x128xf32> to vector<8x128xbf16>
    %62 = arith.mulf %42, %51 : vector<8x1xf32>
    %63 = arith.mulf %32, %62 : vector<8x1xf32>
    %64 = arith.subf %3, %63 : vector<8x1xf32>
    %65 = vector.broadcast %62 : vector<8x1xf32> to vector<8x128xf32>
    %66 = arith.mulf %10, %65 : vector<8x128xf32>
    %67 = vector.broadcast %64 : vector<8x1xf32> to vector<8x128xf32>
    %68 = arith.addf %66, %67 : vector<8x128xf32>
    %cst_29 = arith.constant 0.000000e+00 : f32
    %69 = vector.broadcast %cst_29 : f32 to vector<8x128xf32>
    %70 = arith.maximumf %68, %69 : vector<8x128xf32>
    %71 = arith.truncf %70 : vector<8x128xf32> to vector<8x128xbf16>
    %cst_30 = arith.constant dense<0.000000e+00> : vector<8x128xf32>
    %72 = tpu.matmul %0, %61, %cst_30 {dimension_numbers = #tpu.dot_dimension_numbers<[1], [0], [0], [1], [0, 0, 1, 1], [], []>} : vector<8x8xbf16>, vector<8x128xbf16>, vector<8x128xf32> -> vector<8x128xf32>
    %cst_31 = arith.constant dense<0.000000e+00> : vector<8x128xf32>
    %73 = tpu.matmul %0, %71, %cst_31 {dimension_numbers = #tpu.dot_dimension_numbers<[1], [0], [0], [1], [0, 0, 1, 1], [], []>} : vector<8x8xbf16>, vector<8x128xbf16>, vector<8x128xf32> -> vector<8x128xf32>
    %cst_32 = arith.constant 0.000000e+00 : f32
    %74 = vector.broadcast %cst_32 : f32 to vector<8x1xf32>
    %cst_33 = arith.constant dense<0.000000e+00> : vector<8xf32>
    %75 = vector.multi_reduction <add>, %72, %cst_33 [1] : vector<8x128xf32> to vector<8xf32>
    %76 = vector.shape_cast %75 : vector<8xf32> to vector<8x1xf32>
    %cst_34 = arith.constant 1.280000e+02 : f32
    %77 = vector.broadcast %cst_34 : f32 to vector<8x1xf32>
    %78 = arith.divf %76, %77 : vector<8x1xf32>
    %79 = vector.broadcast %78 : vector<8x1xf32> to vector<8x128xf32>
    %80 = arith.subf %72, %79 : vector<8x128xf32>
    %81 = arith.mulf %80, %80 : vector<8x128xf32>
    %cst_35 = arith.constant dense<0.000000e+00> : vector<8xf32>
    %82 = vector.multi_reduction <add>, %81, %cst_35 [1] : vector<8x128xf32> to vector<8xf32>
    %83 = vector.shape_cast %82 : vector<8xf32> to vector<8x1xf32>
    %cst_36 = arith.constant 1.280000e+02 : f32
    %84 = vector.broadcast %cst_36 : f32 to vector<8x1xf32>
    %85 = arith.divf %83, %84 : vector<8x1xf32>
    %cst_37 = arith.constant 1.000000e-03 : f32
    %86 = vector.broadcast %cst_37 : f32 to vector<8x1xf32>
    %87 = arith.addf %85, %86 : vector<8x1xf32>
    %88 = math.rsqrt %87 : vector<8x1xf32>
    %89 = arith.mulf %88, %88 : vector<8x1xf32>
    %90 = arith.mulf %85, %89 : vector<8x1xf32>
    %91 = arith.addf %74, %90 : vector<8x1xf32>
    %cst_38 = arith.constant dense<0.000000e+00> : vector<8xf32>
    %92 = vector.multi_reduction <add>, %73, %cst_38 [1] : vector<8x128xf32> to vector<8xf32>
    %93 = vector.shape_cast %92 : vector<8xf32> to vector<8x1xf32>
    %cst_39 = arith.constant 1.280000e+02 : f32
    %94 = vector.broadcast %cst_39 : f32 to vector<8x1xf32>
    %95 = arith.divf %93, %94 : vector<8x1xf32>
    %96 = vector.broadcast %95 : vector<8x1xf32> to vector<8x128xf32>
    %97 = arith.subf %73, %96 : vector<8x128xf32>
    %98 = arith.mulf %97, %97 : vector<8x128xf32>
    %cst_40 = arith.constant dense<0.000000e+00> : vector<8xf32>
    %99 = vector.multi_reduction <add>, %98, %cst_40 [1] : vector<8x128xf32> to vector<8xf32>
    %100 = vector.shape_cast %99 : vector<8xf32> to vector<8x1xf32>
    %cst_41 = arith.constant 1.280000e+02 : f32
    %101 = vector.broadcast %cst_41 : f32 to vector<8x1xf32>
    %102 = arith.divf %100, %101 : vector<8x1xf32>
    %cst_42 = arith.constant 1.000000e-03 : f32
    %103 = vector.broadcast %cst_42 : f32 to vector<8x1xf32>
    %104 = arith.addf %102, %103 : vector<8x1xf32>
    %105 = math.rsqrt %104 : vector<8x1xf32>
    %106 = arith.mulf %105, %105 : vector<8x1xf32>
    %107 = arith.mulf %102, %106 : vector<8x1xf32>
    %108 = arith.addf %91, %107 : vector<8x1xf32>
    %cst_43 = arith.constant 5.000000e-01 : f32
    %109 = vector.broadcast %cst_43 : f32 to vector<8x1xf32>
    %110 = arith.mulf %108, %109 : vector<8x1xf32>
    %cst_44 = arith.constant 9.99999974E-6 : f32
    %111 = vector.broadcast %cst_44 : f32 to vector<8x1xf32>
    %112 = arith.addf %110, %111 : vector<8x1xf32>
    %113 = math.rsqrt %112 : vector<8x1xf32>
    %114 = arith.mulf %4, %113 : vector<8x1xf32>
    %115 = arith.mulf %88, %114 : vector<8x1xf32>
    %116 = arith.mulf %78, %115 : vector<8x1xf32>
    %117 = arith.subf %5, %116 : vector<8x1xf32>
    %118 = vector.broadcast %115 : vector<8x1xf32> to vector<8x128xf32>
    %119 = arith.mulf %72, %118 : vector<8x128xf32>
    %120 = vector.broadcast %117 : vector<8x1xf32> to vector<8x128xf32>
    %121 = arith.addf %119, %120 : vector<8x128xf32>
    %cst_45 = arith.constant 0.000000e+00 : f32
    %122 = vector.broadcast %cst_45 : f32 to vector<8x128xf32>
    %123 = arith.maximumf %121, %122 : vector<8x128xf32>
    %124 = arith.truncf %123 : vector<8x128xf32> to vector<8x128xbf16>
    %125 = arith.mulf %105, %114 : vector<8x1xf32>
    %126 = arith.mulf %95, %125 : vector<8x1xf32>
    %127 = arith.subf %5, %126 : vector<8x1xf32>
    %128 = vector.broadcast %125 : vector<8x1xf32> to vector<8x128xf32>
    %129 = arith.mulf %73, %128 : vector<8x128xf32>
    %130 = vector.broadcast %127 : vector<8x1xf32> to vector<8x128xf32>
    %131 = arith.addf %129, %130 : vector<8x128xf32>
    %cst_46 = arith.constant 0.000000e+00 : f32
    %132 = vector.broadcast %cst_46 : f32 to vector<8x128xf32>
    %133 = arith.maximumf %131, %132 : vector<8x128xf32>
    %134 = arith.truncf %133 : vector<8x128xf32> to vector<8x128xbf16>
    %135 = arith.truncf %8 : vector<8x128xf32> to vector<8x128xbf16>
    %136 = tpu.concatenate %124, %135 in 0 : vector<8x128xbf16>, vector<8x128xbf16> -> vector<16x128xbf16>
    %cst_47 = arith.constant dense<0.000000e+00> : vector<16x128xf32>
    %137 = tpu.matmul %1, %136, %cst_47 {dimension_numbers = #tpu.dot_dimension_numbers<[1], [0], [0], [1], [0, 0, 1, 1], [], []>} : vector<16x16xbf16>, vector<16x128xbf16>, vector<16x128xf32> -> vector<16x128xf32>
    %138 = vector.broadcast %6 : vector<16x1xf32> to vector<16x128xf32>
    %139 = arith.addf %137, %138 : vector<16x128xf32>
    %c0_48 = arith.constant 0 : index
    %c0_49 = arith.constant 0 : index
    %c0_50 = arith.constant 0 : index
    %140 = vector.load %arg5[%c0_48, %c0_49, %c0_50] : memref<2x16x128xf32, #tpu.memory_space<vmem>>, vector<1x16x128xf32>
    %141 = vector.shape_cast %140 : vector<1x16x128xf32> to vector<16x128xf32>
    %142 = vector.shape_cast %139 : vector<16x128xf32> to vector<1x16x128xf32>
    tpu.vector_store %arg5[%c0_48, %c0_49, %c0_50], %142 {strides = array<i32>} : memref<2x16x128xf32, #tpu.memory_space<vmem>>, vector<1x16x128xf32>,
    %143 = arith.truncf %10 : vector<8x128xf32> to vector<8x128xbf16>
    %144 = tpu.concatenate %134, %143 in 0 : vector<8x128xbf16>, vector<8x128xbf16> -> vector<16x128xbf16>
    %cst_51 = arith.constant dense<0.000000e+00> : vector<16x128xf32>
    %145 = tpu.matmul %1, %144, %cst_51 {dimension_numbers = #tpu.dot_dimension_numbers<[1], [0], [0], [1], [0, 0, 1, 1], [], []>} : vector<16x16xbf16>, vector<16x128xbf16>, vector<16x128xf32> -> vector<16x128xf32>
    %146 = vector.broadcast %6 : vector<16x1xf32> to vector<16x128xf32>
    %147 = arith.addf %145, %146 : vector<16x128xf32>
    %c1_52 = arith.constant 1 : index
    %c0_53 = arith.constant 0 : index
    %c0_54 = arith.constant 0 : index
    %148 = vector.load %arg5[%c1_52, %c0_53, %c0_54] : memref<2x16x128xf32, #tpu.memory_space<vmem>>, vector<1x16x128xf32>
    %149 = vector.shape_cast %148 : vector<1x16x128xf32> to vector<16x128xf32>
    %150 = vector.shape_cast %147 : vector<16x128xf32> to vector<1x16x128xf32>
    tpu.vector_store %arg5[%c1_52, %c0_53, %c0_54], %150 {strides = array<i32>} : memref<2x16x128xf32, #tpu.memory_space<vmem>>, vector<1x16x128xf32>,
    return
  }
}

</mosaic_0001>

<llo_original>
// kernel: pointcn_forward.1
$region0: #{pointcn_forward.1}
  #allocation0 [shape = 'u32[]', space=smem, size = 0x4, offset = 0x4, fixed_abs, tag = 'smem constant byte address 0x4 - core index']
  #allocation1 [shape = 'u32[144,128]{1,0:T(1,128)}', space=vmem, size = 0x12000, scoped, tag = 'internal scratch']
  %s0 = inlined_call_operand.vmem [shape: f32[2,8,128], index: 0, kind: input, shape index: {}]
  %s1 = inlined_call_operand.vmem [shape: bf16[8,8], index: 1, kind: input, shape index: {}]
  %s2 = inlined_call_operand.vmem [shape: bf16[16,16], index: 2, kind: input, shape index: {}]
  %s3 = inlined_call_operand.vmem [shape: f32[8,4], index: 3, kind: input, shape index: {}]
  %s4 = inlined_call_operand.vmem [shape: f32[16,1], index: 4, kind: input, shape index: {}]
  %s5 = inlined_call_operand.hbm [shape: f32[2,16,128], index: 5, kind: output, shape index: {}]
  %s6 = sld [smem:[#allocation0]]
  $region30: #{pointcn_forward.1} parent=0
    _
  %s8 = ssub.s32 1, %s6
  %s9 = scalar_select 0, %s8, %s6
  $region1: #{pointcn_forward.1} parent=0
    #allocation2 [shape = 'u8[16384]{0}', space=vmem, size = 0x4000, scoped, tag = 'output window, operand 0, single buffered']
    #allocation3 [shape = 's32[1]{0}', space=sflag, size = 0x4, scoped, tag = 'scoped memory for pointcn_forward.1']
    %10 = vsyncpa [#allocation3], 0
    // Predicated region
    $region2: #{pointcn_forward.1} parent=1 // pred_check
      _
    $region3: #{pointcn_forward.1} parent=1 // pred_check_branch
      %12 = sbr.rel (0) target = $region5
    $region4: #{pointcn_forward.1} parent=1 // pred_region
      _
    $region5: #{pointcn_forward.1} parent=1 // pred_fallthru
      _
    // Predicated region
    $region6: #{pointcn_forward.1} parent=1 // pred_check
      _
    $region7: #{pointcn_forward.1} parent=1 // pred_check_branch
      %14 = sbr.rel (0) target = $region9
    $region8: #{pointcn_forward.1} parent=1 // pred_region
      _
    $region9: #{pointcn_forward.1} parent=1 // pred_fallthru
      _
    // Predicated region
    $region10: #{pointcn_forward.1} parent=1 // pred_check
      _
    $region11: #{pointcn_forward.1} parent=1 // pred_check_branch
      %16 = sbr.rel (0) target = $region13
    $region12: #{pointcn_forward.1} parent=1 // pred_region
      _
    $region13: #{pointcn_forward.1} parent=1 // pred_fallthru
      _
    // Predicated region
    $region14: #{pointcn_forward.1} parent=1 // pred_check
      _
    $region15: #{pointcn_forward.1} parent=1 // pred_check_branch
      %18 = sbr.rel (0) target = $region17
    $region16: #{pointcn_forward.1} parent=1 // pred_region
      _
    $region17: #{pointcn_forward.1} parent=1 // pred_fallthru
      _
    // Predicated region
    $region18: #{pointcn_forward.1} parent=1 // pred_check
      _
    $region19: #{pointcn_forward.1} parent=1 // pred_check_branch
      %20 = sbr.rel (0) target = $region21
    $region20: #{pointcn_forward.1} parent=1 // pred_region
      _
    $region21: #{pointcn_forward.1} parent=1 // pred_fallthru
      _
    %v22 = vld [vmem:[%s1] sm:$0xf]
    %v23 = vld [vmem:[%s2] sm:$0xf]
    %v24 = vld [vmem:[%s2 + $0x4] sm:$0xf]
    %v25 = vld [vmem:[%s3] sm:$0xff]
    %v26 = vld [vmem:[%s4] sm:$0xff]
    %v27 = vld [vmem:[%s4 + $0x8] sm:$0xff]
    %v28 = vld [vmem:[%s0] sm:$0xff]
    %s29 = scalar_lea.vmem %s0, 8
    %v30 = vld [vmem:[%s29] sm:$0xff]
    %31 = vadd.xlane.f32.xlu0 %v28
    %v32 = vpop.xlane.xlu0 %31
    %v33 = vrcp.pop 128.0
    %v34 = vmul.f32 %v32, %v33
    %v35 = vsub.f32 %v28, %v34
    %v36 = vmul.f32 %v35, %v35
    %37 = vadd.xlane.f32.xlu0 %v36
    %v38 = vpop.xlane.xlu0 %37
    %v39 = vmul.f32 %v38, %v33
    %v40 = vadd.f32 %v39, 0.001
    %v41 = vrsqrt.pop %v40
    %v42 = vmul.f32 %v41, %v41
    %v43 = vmul.f32 %v39, %v42
    %v44 = vadd.f32 %v43, 0.0
    %45 = vadd.xlane.f32.xlu0 %v30
    %v46 = vpop.xlane.xlu0 %45
    %v47 = vmul.f32 %v46, %v33
    %v48 = vsub.f32 %v30, %v47
    %v49 = vmul.f32 %v48, %v48
    %50 = vadd.xlane.f32.xlu0 %v49
    %v51 = vpop.xlane.xlu0 %50
    %v52 = vmul.f32 %v51, %v33
    %v53 = vadd.f32 %v52, 0.001
    %v54 = vrsqrt.pop %v53
    %v55 = vmul.f32 %v54, %v54
    %v56 = vmul.f32 %v52, %v55
    %v57 = vadd.f32 %v44, %v56
    %v58 = vmul.f32 %v57, 0.5
    %v59 = vadd.f32 %v58, 1e-05
    %v60 = vrsqrt.pop %v59
    %v61 = vmul.f32 %v25, %v60
    %v62 = vmul.f32 %v41, %v61
    %v63 = vmul.f32 %v34, %v62
    %65 = vrot.lane.b32.xlu0 %v63, 1
    %v66 = vpop.permute.xlu0 %65
    %v68 = vsub.f32 %v25, %v66
    %70 = vset.pattern.permute.xlu0 0
    %71 = vperm.xlu0 %70, %v62
    %v72 = vpop.permute.xlu0 %71
    %v74 = vmul.f32 %v28, %v72
    %76 = vset.pattern.permute.xlu0 1
    %77 = vperm.xlu0 %76, %v68
    %v78 = vpop.permute.xlu0 %77
    %v80 = vadd.f32 %v74, %v78
    %v81 = vmax.f32 %v80, 0.0
    %v82 = vpack.c.bf16 %v81, %v81
    %v83 = vmul.f32 %v54, %v61
    %v84 = vmul.f32 %v47, %v83
    %86 = vrot.lane.b32.xlu0 %v84, 1
    %v87 = vpop.permute.xlu0 %86
    %v89 = vsub.f32 %v25, %v87
    %91 = vset.pattern.permute.xlu0 0
    %92 = vperm.xlu0 %91, %v83
    %v93 = vpop.permute.xlu0 %92
    %v95 = vmul.f32 %v30, %v93
    %97 = vset.pattern.permute.xlu0 1
    %98 = vperm.xlu0 %97, %v89
    %v99 = vpop.permute.xlu0 %98
    %v101 = vadd.f32 %v95, %v99
    %v102 = vmax.f32 %v101, 0.0
    %v103 = vpack.c.bf16 %v102, %v102
    %vm104 = vcmask 64512
    %v106 = vsel %vm104, %v22, 0
    %vm108 = vcmask 1043456
    %v110 = vsel %vm108, %v82, 0
    %112 = vmatprep.subr.bf16.mxu0 0
    %113 = vmatpush1.bf16.msra.mxu0 0
    %114 = vmatprep.subr.bf16.mxu0 0
    %115 = vmatpush1.bf16.msra.mxu0 0
    %116 = vmatprep.subr.bf16.mxu0 0
    %117 = vmatpush1.bf16.msra.mxu0 0
    %118 = vmatprep.subr.bf16.mxu0 0
    %119 = vmatpush1.bf16.msra.mxu0 0
    %120 = vmatprep.subr.bf16.mxu0 0
    %121 = vmatpush1.bf16.msra.mxu0 0
    %122 = vmatprep.subr.bf16.mxu0 0
    %123 = vmatpush1.bf16.msra.mxu0 0
    %124 = vmatprep.subr.bf16.mxu0 0
    %125 = vmatpush1.bf16.msra.mxu0 0
    %126 = vmatprep.subr.bf16.mxu0 0
    %127 = vmatpush1.bf16.msra.mxu0 %v110
    %128 = vmatprep.subr.bf16.mxu0 0
    %129 = vmatpush2.bf16.msra.mxu0 0
    %130 = vmatprep.subr.bf16.mxu0 0
    %131 = vmatpush2.bf16.msra.mxu0 0
    %132 = vmatprep.subr.bf16.mxu0 0
    %133 = vmatpush2.bf16.msra.mxu0 0
    %134 = vmatprep.subr.bf16.mxu0 0
    %135 = vmatpush2.bf16.msra.mxu0 0
    %136 = vmatprep.subr.bf16.mxu0 0
    %137 = vmatpush2.bf16.msra.mxu0 0
    %138 = vmatprep.subr.bf16.mxu0 0
    %139 = vmatpush2.bf16.msra.mxu0 0
    %140 = vmatprep.subr.bf16.mxu0 0
    %141 = vmatpush2.bf16.msra.mxu0 0
    %142 = vmatprep.subr.bf16.mxu0 0
    %143 = vmatpush2.bf16.msra.mxu0 0
    %144 = vmatprep.mubr.bf16.mxu0 0
    %145 = vmatmul.mubr.bf16.gmra.mxu0 %v106
    %v146 = vpop.f32.mrf.mxu0
    %v147 = vadd.f32 0.0, %v146
    %v148 = vpop.f32.mrf.mxu0
    %v149 = vpop.f32.mrf.mxu0
    %v150 = vpop.f32.mrf.mxu0
    %151 = vdwg.mxu0
    %v153 = vsel %vm108, %v103, 0
    %155 = vmatprep.subr.bf16.mxu0 0
    %156 = vmatpush1.bf16.msra.mxu0 0
    %157 = vmatprep.subr.bf16.mxu0 0
    %158 = vmatpush1.bf16.msra.mxu0 0
    %159 = vmatprep.subr.bf16.mxu0 0
    %160 = vmatpush1.bf16.msra.mxu0 0
    %161 = vmatprep.subr.bf16.mxu0 0
    %162 = vmatpush1.bf16.msra.mxu0 0
    %163 = vmatprep.subr.bf16.mxu0 0
    %164 = vmatpush1.bf16.msra.mxu0 0
    %165 = vmatprep.subr.bf16.mxu0 0
    %166 = vmatpush1.bf16.msra.mxu0 0
    %167 = vmatprep.subr.bf16.mxu0 0
    %168 = vmatpush1.bf16.msra.mxu0 0
    %169 = vmatprep.subr.bf16.mxu0 0
    %170 = vmatpush1.bf16.msra.mxu0 %v153
    %171 = vmatprep.subr.bf16.mxu0 0
    %172 = vmatpush2.bf16.msra.mxu0 0
    %173 = vmatprep.subr.bf16.mxu0 0
    %174 = vmatpush2.bf16.msra.mxu0 0
    %175 = vmatprep.subr.bf16.mxu0 0
    %176 = vmatpush2.bf16.msra.mxu0 0
    %177 = vmatprep.subr.bf16.mxu0 0
    %178 = vmatpush2.bf16.msra.mxu0 0
    %179 = vmatprep.subr.bf16.mxu0 0
    %180 = vmatpush2.bf16.msra.mxu0 0
    %181 = vmatprep.subr.bf16.mxu0 0
    %182 = vmatpush2.bf16.msra.mxu0 0
    %183 = vmatprep.subr.bf16.mxu0 0
    %184 = vmatpush2.bf16.msra.mxu0 0
    %185 = vmatprep.subr.bf16.mxu0 0
    %186 = vmatpush2.bf16.msra.mxu0 0
    %187 = vmatprep.mubr.bf16.mxu0 0
    %188 = vmatmul.mubr.bf16.gmra.mxu0 %v106
    %v189 = vpop.f32.mrf.mxu0
    %v190 = vadd.f32 0.0, %v189
    %v191 = vpop.f32.mrf.mxu0
    %v192 = vpop.f32.mrf.mxu0
    %v193 = vpop.f32.mrf.mxu0
    %194 = vdwg.mxu0
    %195 = vadd.xlane.f32.xlu0 %v147
    %v196 = vpop.xlane.xlu0 %195
    %v197 = vmul.f32 %v196, %v33
    %v198 = vsub.f32 %v147, %v197
    %v199 = vmul.f32 %v198, %v198
    %200 = vadd.xlane.f32.xlu0 %v199
    %v201 = vpop.xlane.xlu0 %200
    %v202 = vmul.f32 %v201, %v33
    %v203 = vadd.f32 %v202, 0.001
    %v204 = vrsqrt.pop %v203
    %v205 = vmul.f32 %v204, %v204
    %v206 = vmul.f32 %v202, %v205
    %v207 = vadd.f32 %v206, 0.0
    %208 = vadd.xlane.f32.xlu0 %v190
    %v209 = vpop.xlane.xlu0 %208
    %v210 = vmul.f32 %v209, %v33
    %v211 = vsub.f32 %v190, %v210
    %v212 = vmul.f32 %v211, %v211
    %213 = vadd.xlane.f32.xlu0 %v212
    %v214 = vpop.xlane.xlu0 %213
    %v215 = vmul.f32 %v214, %v33
    %v216 = vadd.f32 %v215, 0.001
    %v217 = vrsqrt.pop %v216
    %v218 = vmul.f32 %v217, %v217
    %v219 = vmul.f32 %v215, %v218
    %v220 = vadd.f32 %v207, %v219
    %v221 = vmul.f32 %v220, 0.5
    %v222 = vadd.f32 %v221, 1e-05
    %v223 = vrsqrt.pop %v222
    %v224 = vmul.f32 %v25, %v223
    %v225 = vmul.f32 %v204, %v224
    %v226 = vmul.f32 %v197, %v225
    %228 = vrot.lane.b32.xlu0 %v226, 1
    %v229 = vpop.permute.xlu0 %228
    %v231 = vsub.f32 %v25, %v229
    %233 = vset.pattern.permute.xlu0 2
    %234 = vperm.xlu0 %233, %v225
    %v235 = vpop.permute.xlu0 %234
    %v237 = vmul.f32 %v147, %v235
    %239 = vset.pattern.permute.xlu0 3
    %240 = vperm.xlu0 %239, %v231
    %v241 = vpop.permute.xlu0 %240
    %v243 = vadd.f32 %v237, %v241
    %v244 = vmax.f32 %v243, 0.0
    %v245 = vpack.c.bf16 %v244, %v244
    %v246 = vmul.f32 %v217, %v224
    %v247 = vmul.f32 %v210, %v246
    %249 = vrot.lane.b32.xlu0 %v247, 1
    %v250 = vpop.permute.xlu0 %249
    %v252 = vsub.f32 %v25, %v250
    %254 = vset.pattern.permute.xlu0 2
    %255 = vperm.xlu0 %254, %v246
    %v256 = vpop.permute.xlu0 %255
    %v258 = vmul.f32 %v190, %v256
    %260 = vset.pattern.permute.xlu0 3
    %261 = vperm.xlu0 %260, %v252
    %v262 = vpop.permute.xlu0 %261
    %v264 = vadd.f32 %v258, %v262
    %v265 = vmax.f32 %v264, 0.0
    %v266 = vpack.c.bf16 %v265, %v265
    %v267 = vpack.c.bf16 %v28, %v28
    %v269 = vrot.slane %v267, 4
    %v272 = vsel %vm108, %v245, %v269
    %275 = vset.pattern.permute.xlu0 0
    %276 = vperm.xlu0 %275, %v26
    %v277 = vpop.permute.xlu0 %276
    %280 = vset.pattern.permute.xlu0 0
    %281 = vperm.xlu0 %280, %v27
    %v282 = vpop.permute.xlu0 %281
    %v286 = vunpack.c.l.b16 %v23
    %v287 = vunpack.c.l.b16 %v24
    %v288 = vpack.c.b16 %v287, %v286
    %vm289 = vcmask 130048
    %v291 = vsel %vm289, %v288, 0
    %293 = vmatprep.subr.bf16.mxu0 0
    %294 = vmatpush1.bf16.msra.mxu0 0
    %295 = vmatprep.subr.bf16.mxu0 0
    %296 = vmatpush1.bf16.msra.mxu0 0
    %297 = vmatprep.subr.bf16.mxu0 0
    %298 = vmatpush1.bf16.msra.mxu0 0
    %299 = vmatprep.subr.bf16.mxu0 0
    %300 = vmatpush1.bf16.msra.mxu0 0
    %301 = vmatprep.subr.bf16.mxu0 0
    %302 = vmatpush1.bf16.msra.mxu0 0
    %303 = vmatprep.subr.bf16.mxu0 0
    %304 = vmatpush1.bf16.msra.mxu0 0
    %305 = vmatprep.subr.bf16.mxu0 0
    %306 = vmatpush1.bf16.msra.mxu0 0
    %307 = vmatprep.subr.bf16.mxu0 0
    %308 = vmatpush1.bf16.msra.mxu0 %v272
    %309 = vmatprep.subr.bf16.mxu0 0
    %310 = vmatpush2.bf16.msra.mxu0 0
    %311 = vmatprep.subr.bf16.mxu0 0
    %312 = vmatpush2.bf16.msra.mxu0 0
    %313 = vmatprep.subr.bf16.mxu0 0
    %314 = vmatpush2.bf16.msra.mxu0 0
    %315 = vmatprep.subr.bf16.mxu0 0
    %316 = vmatpush2.bf16.msra.mxu0 0
    %317 = vmatprep.subr.bf16.mxu0 0
    %318 = vmatpush2.bf16.msra.mxu0 0
    %319 = vmatprep.subr.bf16.mxu0 0
    %320 = vmatpush2.bf16.msra.mxu0 0
    %321 = vmatprep.subr.bf16.mxu0 0
    %322 = vmatpush2.bf16.msra.mxu0 0
    %323 = vmatprep.subr.bf16.mxu0 0
    %324 = vmatpush2.bf16.msra.mxu0 0
    %325 = vmatprep.mubr.bf16.mxu0 0
    %326 = vmatmul.mubr.bf16.gmra.mxu0 %v291
    %v327 = vpop.f32.mrf.mxu0
    %v328 = vadd.f32 %v277, %v327
    %v329 = vpop.f32.mrf.mxu0
    %v330 = vpop.f32.mrf.mxu0
    %v331 = vadd.f32 %v282, %v330
    %v332 = vpop.f32.mrf.mxu0
    %333 = vdwg.mxu0
    %334 = vst [vmem:[#allocation2] sm:$0xff] %v328
    %335 = vst [vmem:[#allocation2 + $0x8] sm:$0xff] %v331
    %v336 = vpack.c.bf16 %v30, %v30
    %v338 = vrot.slane %v336, 4
    %v341 = vsel %vm108, %v266, %v338
    %343 = vmatprep.subr.bf16.mxu0 0
    %344 = vmatpush1.bf16.msra.mxu0 0
    %345 = vmatprep.subr.bf16.mxu0 0
    %346 = vmatpush1.bf16.msra.mxu0 0
    %347 = vmatprep.subr.bf16.mxu0 0
    %348 = vmatpush1.bf16.msra.mxu0 0
    %349 = vmatprep.subr.bf16.mxu0 0
    %350 = vmatpush1.bf16.msra.mxu0 0
    %351 = vmatprep.subr.bf16.mxu0 0
    %352 = vmatpush1.bf16.msra.mxu0 0
    %353 = vmatprep.subr.bf16.mxu0 0
    %354 = vmatpush1.bf16.msra.mxu0 0
    %355 = vmatprep.subr.bf16.mxu0 0
    %356 = vmatpush1.bf16.msra.mxu0 0
    %357 = vmatprep.subr.bf16.mxu0 0
    %358 = vmatpush1.bf16.msra.mxu0 %v341
    %359 = vmatprep.subr.bf16.mxu0 0
    %360 = vmatpush2.bf16.msra.mxu0 0
    %361 = vmatprep.subr.bf16.mxu0 0
    %362 = vmatpush2.bf16.msra.mxu0 0
    %363 = vmatprep.subr.bf16.mxu0 0
    %364 = vmatpush2.bf16.msra.mxu0 0
    %365 = vmatprep.subr.bf16.mxu0 0
    %366 = vmatpush2.bf16.msra.mxu0 0
    %367 = vmatprep.subr.bf16.mxu0 0
    %368 = vmatpush2.bf16.msra.mxu0 0
    %369 = vmatprep.subr.bf16.mxu0 0
    %370 = vmatpush2.bf16.msra.mxu0 0
    %371 = vmatprep.subr.bf16.mxu0 0
    %372 = vmatpush2.bf16.msra.mxu0 0
    %373 = vmatprep.subr.bf16.mxu0 0
    %374 = vmatpush2.bf16.msra.mxu0 0
    %375 = vmatprep.mubr.bf16.mxu0 0
    %376 = vmatmul.mubr.bf16.gmra.mxu0 %v291
    %v377 = vpop.f32.mrf.mxu0
    %v378 = vadd.f32 %v277, %v377
    %v379 = vpop.f32.mrf.mxu0
    %v380 = vpop.f32.mrf.mxu0
    %v381 = vadd.f32 %v282, %v380
    %v382 = vpop.f32.mrf.mxu0
    %383 = vdwg.mxu0
    %s384 = scalar_lea.vmem [#allocation2], 16
    %385 = vst [vmem:[%s384] sm:$0xff] %v378
    %386 = vst [vmem:[%s384 + $0x8] sm:$0xff] %v381
    // Predicated region
    $region22: #{pointcn_forward.1} parent=1 // pred_check
      _
    $region23: #{pointcn_forward.1} parent=1 // pred_check_branch
      %388 = sbr.rel (0) target = $region25
    $region24: #{pointcn_forward.1} parent=1 // pred_region
      %s390 = ssub.s32 512, 512
      %391 = vsyncadd [#allocation3], %s390
      %s392 = sshll.u32 [#allocation2], 4
      %s393 = int_to_ptr.vmem [resolvable:$true] %s392
      %398 = dma.vmem_to_hbm [thread:$0]  %s393, 512, %s5, [#allocation3], 128, 128, 8
    $region25: #{pointcn_forward.1} parent=1 // pred_fallthru
      _
    // Predicated region
    $region26: #{pointcn_forward.1} parent=1 // pred_check
      _
    $region27: #{pointcn_forward.1} parent=1 // pred_check_branch
      %400 = sbr.rel (0) target = $region29
    $region28: #{pointcn_forward.1} parent=1 // pred_region
      %401 = dma.done [#allocation3], 512
    $region29: #{pointcn_forward.1} parent=1 // pred_fallthru
      _
    %402 = vsyncpa [#allocation3], 1

</llo_original>
